<compile_context>
chip_gen: v7x
topology: tpu7x:2x2x1
jax: 0.10.0
libtpu: 0.0.40
codegen_flags: <defaults>
</compile_context>

<pallas_src>
import functools

import jax
import jax.numpy as jnp
from jax.experimental import pallas as pl
from jax.experimental.pallas import tpu as pltpu

LANE = 128


def _round_up(v: int, m: int) -> int:
    return ((v + m - 1) // m) * m


def mlp_kernel(x_ref, w1_ref, b1_ref, w2_ref, b2_ref, o_ref):
    # fc1: (TB, In) -> bf16 MXU operands, f32 accumulation; bias/ReLU in f32.
    h = jnp.dot(x_ref[...].astype(w1_ref.dtype), w1_ref[...],
                preferred_element_type=jnp.float32)
    h = jnp.maximum(h + b1_ref[...], 0.0)
    # fc2: cast hidden back to bf16 for the MXU, accumulate in f32.
    y = jnp.dot(h.astype(w2_ref.dtype), w2_ref[...],
                preferred_element_type=jnp.float32)
    o_ref[...] = (y + b2_ref[...]).astype(o_ref.dtype)


def prepare_params(w1, b1, w2, b2):
    """One-time (out of the forward jit path) padding + bf16 cast.

    Weights are stored as (in_features, out_features) == PyTorch weight.T.
    Hidden / output feature dims are zero-padded to lane multiples (128) so
    every MXU operand and the output store are lane-dense; the input-feature
    dim is left unpadded (the x block uses the full array dim).
    """
    In, H = w1.shape
    Out = w2.shape[1]
    H_p = _round_up(H, LANE)
    Out_p = _round_up(Out, LANE)
    # TODO(synk): for non-toy In/H, pad the contraction dims to multiples of
    # 256 and K-tile the matmuls to fill v6e/v7x's 2x256^2 MXU.
    w1_p = jnp.zeros((In, H_p), jnp.bfloat16).at[:, :H].set(
        w1.astype(jnp.bfloat16))
    b1_p = jnp.zeros((1, H_p), jnp.float32).at[:, :H].set(
        b1.astype(jnp.float32).reshape(1, H))
    w2_p = jnp.zeros((H_p, Out_p), jnp.bfloat16).at[:H, :Out].set(
        w2.astype(jnp.bfloat16))
    b2_p = jnp.zeros((1, Out_p), jnp.float32).at[:, :Out].set(
        b2.astype(jnp.float32).reshape(1, Out))
    return w1_p, b1_p, w2_p, b2_p


def _resident_spec(shape):
    """Constant-index (weight/bias) block, pinned to single buffering."""
    try:
        return pl.BlockSpec(shape, lambda i: (0, 0),
                            pipeline_mode=pl.Buffered(1))
    except TypeError:  # older jax without pipeline_mode kwarg
        return pl.BlockSpec(shape, lambda i: (0, 0))


@functools.partial(jax.jit, static_argnames=("output_size", "block_b"))
def simple_nn_forward(x, w1_p, b1_p, w2_p, b2_p, *, output_size,
                      block_b=1024):
    """x: (B, In) in caller dtype; params are pre-padded via prepare_params."""
    B, In = x.shape
    H_p = w1_p.shape[1]
    Out_p = w2_p.shape[1]
    out_dtype = x.dtype

    # --- batch tiling: even grid count >= 2 when the batch allows, so v7x's
    #     second TensorCore is never idle; TB derived from step count so a B
    #     just above the tile size is not padded by ~2x. ---------------------
    B8 = _round_up(B, 8)
    if B8 <= 16:
        n_steps = 1
    else:
        n_steps = max(2, pl.cdiv(B8, block_b))
        if n_steps % 2:
            n_steps += 1
    TB = _round_up(pl.cdiv(B8, n_steps), 8)
    B_p = TB * n_steps
    x_p = x if B_p == B else jnp.pad(x, ((0, B_p - B), (0, 0)))

    # --- generation-aware VMEM budget with headroom ------------------------
    try:
        vmem_cap = pltpu.get_tpu_info().vmem_capacity_bytes
    except Exception:
        vmem_cap = 64 * 1024 * 1024  # conservative (v7x per-TC) fallback
    out_isz = jnp.dtype(out_dtype).itemsize
    streamed = 2 * (TB * In * x.dtype.itemsize + TB * Out_p * out_isz)
    resident = (In * H_p + H_p * Out_p) * 2 + (H_p + Out_p) * 4
    interm = TB * H_p * 4
    need = int(1.5 * (streamed + resident + interm)) + (4 << 20)
    vmem_limit = int(min(vmem_cap - (12 << 20), max(32 << 20, need)))

    out_p = pl.pallas_call(
        mlp_kernel,
        out_shape=jax.ShapeDtypeStruct((B_p, Out_p), out_dtype),
        grid_spec=pltpu.PrefetchScalarGridSpec(
            num_scalar_prefetch=0,
            grid=(n_steps,),
            in_specs=[
                # streaming activation tile (double-buffered by default);
                # last block dim == full array dim, so In needs no padding.
                pl.BlockSpec((TB, In), lambda i: (i, 0)),
                # resident, single-buffered weights / biases
                _resident_spec((In, H_p)),
                _resident_spec((1, H_p)),
                _resident_spec((H_p, Out_p)),
                _resident_spec((1, Out_p)),
            ],
            out_specs=pl.BlockSpec((TB, Out_p), lambda i: (i, 0)),
        ),
        compiler_params=pltpu.CompilerParams(
            dimension_semantics=("parallel",),
            vmem_limit_bytes=vmem_limit,
        ),
    )(x_p, w1_p, b1_p, w2_p, b2_p)

    # Drop batch / output-feature padding (no dtype cast needed any more).
    return out_p[:B, :output_size]


def init_params(key, input_size, hidden_size, output_size, dtype=jnp.float32):
    """Deterministic init mimicking nn.Linear's U(-1/sqrt(fan_in), 1/sqrt(fan_in))."""
    k1, k2, k3, k4 = jax.random.split(key, 4)
    bound1 = 1.0 / jnp.sqrt(jnp.float32(input_size))
    bound2 = 1.0 / jnp.sqrt(jnp.float32(hidden_size))
    # Stored as (in_features, out_features) == PyTorch weight.T
    w1 = jax.random.uniform(k1, (input_size, hidden_size), dtype,
                            minval=-bound1, maxval=bound1)
    b1 = jax.random.uniform(k2, (1, hidden_size), dtype,
                            minval=-bound1, maxval=bound1)
    w2 = jax.random.uniform(k3, (hidden_size, output_size), dtype,
                            minval=-bound2, maxval=bound2)
    b2 = jax.random.uniform(k4, (1, output_size), dtype,
                            minval=-bound2, maxval=bound2)
    return w1, b1, w2, b2


if __name__ == "__main__":
    batch = 64           # -> even grid=(2,), TB=32, no batch padding
    input_size = 32
    hidden_size = 64
    output_size = 16

    key = jax.random.PRNGKey(0)
    kx, kp = jax.random.split(key)
    x = jax.random.normal(kx, (batch, input_size), jnp.float32)
    w1, b1, w2, b2 = init_params(kp, input_size, hidden_size, output_size)

    # One-time padding / bf16 cast, hoisted out of the per-call path.
    w1_p, b1_p, w2_p, b2_p = prepare_params(w1, b1, w2, b2)

    out = simple_nn_forward(x, w1_p, b1_p, w2_p, b2_p,
                            output_size=output_size)
    out = jax.block_until_ready(out)

    # Pure-JAX f32 reference (kernel uses bf16 MXU operands -> loose tolerance).
    ref = jnp.maximum(x @ w1 + b1, 0.0) @ w2 + b2
    assert out.shape == (batch, output_size)
    assert out.dtype == x.dtype
    assert jnp.allclose(out, ref, atol=3e-2, rtol=3e-2), (
        float(jnp.max(jnp.abs(out - ref))))

    print("KERNEL_OK")
</pallas_src>

<mosaic_0001>
module attributes {stable_mosaic.version = 11 : i64} {
  func.func @mlp_kernel(%arg0: i32, %arg1: memref<32x32xf32, #tpu.memory_space<vmem>>, %arg2: memref<32x128xbf16, #tpu.memory_space<vmem>>, %arg3: memref<1x128xf32, #tpu.memory_space<vmem>>, %arg4: memref<128x128xbf16, #tpu.memory_space<vmem>>, %arg5: memref<1x128xf32, #tpu.memory_space<vmem>>, %arg6: memref<32x128xf32, #tpu.memory_space<vmem>>) attributes {dimension_semantics = [#tpu.dimension_semantics<parallel>], iteration_bounds = array<i64: 2>, scalar_prefetch = 0 : i64, scratch_operands = 0 : i64, tpu.core_type = #tpu.core_type<tc>, window_params = [{transform_indices = @transform_0, window_bounds = array<i64: 32, 32>}, {pipeline_mode = #tpu.pipeline_mode<synchronous>, transform_indices = @transform_1, window_bounds = array<i64: 32, 128>}, {pipeline_mode = #tpu.pipeline_mode<synchronous>, transform_indices = @transform_2, window_bounds = array<i64: 1, 128>}, {pipeline_mode = #tpu.pipeline_mode<synchronous>, transform_indices = @transform_3, window_bounds = array<i64: 128, 128>}, {pipeline_mode = #tpu.pipeline_mode<synchronous>, transform_indices = @transform_4, window_bounds = array<i64: 1, 128>}, {transform_indices = @transform_5, window_bounds = array<i64: 32, 128>}]} {
    %c0 = arith.constant 0 : index
    %c0_0 = arith.constant 0 : index
    %0 = vector.load %arg1[%c0, %c0_0] : memref<32x32xf32, #tpu.memory_space<vmem>>, vector<32x32xf32>
    %1 = arith.truncf %0 : vector<32x32xf32> to vector<32x32xbf16>
    %c0_1 = arith.constant 0 : index
    %c0_2 = arith.constant 0 : index
    %2 = vector.load %arg2[%c0_1, %c0_2] : memref<32x128xbf16, #tpu.memory_space<vmem>>, vector<32x128xbf16>
    %cst = arith.constant dense<0.000000e+00> : vector<32x128xf32>
    %3 = tpu.matmul %1, %2, %cst {dimension_numbers = #tpu.dot_dimension_numbers<[1], [0], [0], [1], [0, 0, 1, 1], [], []>} : vector<32x32xbf16>, vector<32x128xbf16>, vector<32x128xf32> -> vector<32x128xf32>
    %c0_3 = arith.constant 0 : index
    %c0_4 = arith.constant 0 : index
    %4 = vector.load %arg3[%c0_3, %c0_4] : memref<1x128xf32, #tpu.memory_space<vmem>>, vector<1x128xf32>
    %5 = vector.broadcast %4 : vector<1x128xf32> to vector<32x128xf32>
    %6 = arith.addf %3, %5 : vector<32x128xf32>
    %cst_5 = arith.constant 0.000000e+00 : f32
    %7 = vector.broadcast %cst_5 : f32 to vector<32x128xf32>
    %8 = arith.maximumf %6, %7 : vector<32x128xf32>
    %9 = arith.truncf %8 : vector<32x128xf32> to vector<32x128xbf16>
    %c0_6 = arith.constant 0 : index
    %c0_7 = arith.constant 0 : index
    %10 = vector.load %arg4[%c0_6, %c0_7] : memref<128x128xbf16, #tpu.memory_space<vmem>>, vector<128x128xbf16>
    %cst_8 = arith.constant dense<0.000000e+00> : vector<32x128xf32>
    %11 = tpu.matmul %9, %10, %cst_8 {dimension_numbers = #tpu.dot_dimension_numbers<[1], [0], [0], [1], [0, 0, 1, 1], [], []>} : vector<32x128xbf16>, vector<128x128xbf16>, vector<32x128xf32> -> vector<32x128xf32>
    %c0_9 = arith.constant 0 : index
    %c0_10 = arith.constant 0 : index
    %12 = vector.load %arg5[%c0_9, %c0_10] : memref<1x128xf32, #tpu.memory_space<vmem>>, vector<1x128xf32>
    %13 = vector.broadcast %12 : vector<1x128xf32> to vector<32x128xf32>
    %14 = arith.addf %11, %13 : vector<32x128xf32>
    %c0_11 = arith.constant 0 : index
    %c0_12 = arith.constant 0 : index
    %15 = vector.load %arg6[%c0_11, %c0_12] : memref<32x128xf32, #tpu.memory_space<vmem>>, vector<32x128xf32>
    tpu.vector_store %arg6[%c0_11, %c0_12], %14 {strides = array<i32>} : memref<32x128xf32, #tpu.memory_space<vmem>>, vector<32x128xf32>,
    return
  }
  func.func @transform_0(%arg0: i32) -> (i32, i32) {
    %c0_i32 = arith.constant 0 : i32
    %c0_i32_0 = arith.constant 0 : i32
    return %arg0, %c0_i32 : i32, i32
  }
  func.func @transform_1(%arg0: i32) -> (i32, i32) {
    %c0_i32 = arith.constant 0 : i32
    %c0_i32_0 = arith.constant 0 : i32
    %c0_i32_1 = arith.constant 0 : i32
    return %c0_i32, %c0_i32_0 : i32, i32
  }
  func.func @transform_2(%arg0: i32) -> (i32, i32) {
    %c0_i32 = arith.constant 0 : i32
    %c0_i32_0 = arith.constant 0 : i32
    %c0_i32_1 = arith.constant 0 : i32
    return %c0_i32, %c0_i32_0 : i32, i32
  }
  func.func @transform_3(%arg0: i32) -> (i32, i32) {
    %c0_i32 = arith.constant 0 : i32
    %c0_i32_0 = arith.constant 0 : i32
    %c0_i32_1 = arith.constant 0 : i32
    return %c0_i32, %c0_i32_0 : i32, i32
  }
  func.func @transform_4(%arg0: i32) -> (i32, i32) {
    %c0_i32 = arith.constant 0 : i32
    %c0_i32_0 = arith.constant 0 : i32
    %c0_i32_1 = arith.constant 0 : i32
    return %c0_i32, %c0_i32_0 : i32, i32
  }
  func.func @transform_5(%arg0: i32) -> (i32, i32) {
    %c0_i32 = arith.constant 0 : i32
    %c0_i32_0 = arith.constant 0 : i32
    return %arg0, %c0_i32 : i32, i32
  }
}

</mosaic_0001>

<llo_original>
// kernel: simple_nn_forward.1
$region0: #{simple_nn_forward.1}
  #allocation0 [shape = 'u32[]', space=smem, size = 0x4, offset = 0x4, fixed_abs, tag = 'smem constant byte address 0x4 - core index']
  #allocation1 [shape = 'u32[144,128]{1,0:T(1,128)}', space=vmem, size = 0x12000, scoped, tag = 'internal scratch']
  %s0 = inlined_call_operand.vmem [shape: f32[64,32], index: 0, kind: input, shape index: {}]
  %s1 = inlined_call_operand.vmem [shape: bf16[32,128], index: 1, kind: input, shape index: {}]
  %s2 = inlined_call_operand.vmem [shape: f32[1,128], index: 2, kind: input, shape index: {}]
  %s3 = inlined_call_operand.vmem [shape: bf16[128,128], index: 3, kind: input, shape index: {}]
  %s4 = inlined_call_operand.vmem [shape: f32[1,128], index: 4, kind: input, shape index: {}]
  %s5 = inlined_call_operand.vmem [shape: f32[64,128], index: 5, kind: output, shape index: {}]
  %s6 = sld [smem:[#allocation0]]
  $region53: #{simple_nn_forward.1} parent=0
    _
  %s8 = ssub.s32 1, %s6
  %s9 = scalar_select 0, %s8, %s6
  loop: start=0, step=1, limit=4
  $region2: #{simple_nn_forward.1} parent=0 // loop_pre_header
    _
  $region3: #{simple_nn_forward.1} parent=0 // loop_header
    %s11 = sphi 0, %s15
    %p12 = scmp.ge.s32.totalorder %s11, 4
    %s21 = sphi 0, %s23
    %s24 = sphi 0, %s21
    %s25 = sphi 0, %s24
    %s41 = sphi 0, %s25
    %s45 = sphi 0, %s45
    %s47 = sphi 0, %s45
    %s48 = sphi 0, %s47
    %s62 = sphi 0, %s48
    %s66 = sphi 0, %s66
    %s68 = sphi 0, %s66
    %s69 = sphi 0, %s68
    %s83 = sphi 0, %s69
    %s87 = sphi 0, %s87
    %s89 = sphi 0, %s87
    %s90 = sphi 0, %s89
    %s104 = sphi 0, %s90
    %s108 = sphi 0, %s108
    %s110 = sphi 0, %s108
    %s111 = sphi 0, %s110
    %s125 = sphi 0, %s111
    %s131 = sphi 0, %s133
    %s134 = sphi 0, %s131
    %s135 = sphi 0, %s134
    %s151 = sphi 0, %s135
  $region4: #{simple_nn_forward.1} parent=0 // loop_header_branch
    %14 = sbr.rel (%p12) target = $region8
  $region5: #{simple_nn_forward.1} parent=0 // loop_body
    %s16 = ssub.s32 %s11, 1
    %s17 = ssub.s32 %s11, 2
    %s18 = sadd.s32 %s11, 1
    %s19 = ssub.s32 %s11, %s18
    %p20 = scmp.eq.s32.totalorder %s19, 0
    %s22 = sadd.s32 %s21, 1
    %s23 = scalar_select %p20, %s21, %s22
    %p26 = pneg %p20
    %p27 = scmp.eq.s32.totalorder %s11, 1
    %p28 = por %p26, %p27
    %p29 = scmp.ne.s32.totalorder %s21, %s24
    %p30 = scmp.eq.s32.totalorder %s11, 0
    %p31 = por %p29, %p30
    %p32 = scmp.ne.s32.totalorder %s21, %s24
    %p33 = scmp.eq.s32.totalorder %s16, 1
    %p34 = por %p32, %p33
    %p35 = scmp.ne.s32.totalorder %s24, %s25
    %p36 = scmp.eq.s32.totalorder %s16, 0
    %p37 = por %p35, %p36
    %p38 = scmp.ne.s32.totalorder %s24, %s25
    %p39 = scmp.eq.s32.totalorder %s17, 1
    %p40 = por %p38, %p39
    %p42 = scmp.ne.s32.totalorder %s25, %s41
    %p43 = scmp.eq.s32.totalorder %s17, 0
    %p44 = por %p42, %p43
    %s46 = sadd.s32 %s45, 1
    %p49 = scmp.eq.s32.totalorder %s11, 1
    %p50 = scmp.ne.s32.totalorder %s45, %s47
    %p51 = scmp.eq.s32.totalorder %s11, 0
    %p52 = por %p50, %p51
    %p53 = scmp.ne.s32.totalorder %s45, %s47
    %p54 = scmp.eq.s32.totalorder %s16, 1
    %p55 = por %p53, %p54
    %p56 = scmp.ne.s32.totalorder %s47, %s48
    %p57 = scmp.eq.s32.totalorder %s16, 0
    %p58 = por %p56, %p57
    %p59 = scmp.ne.s32.totalorder %s47, %s48
    %p60 = scmp.eq.s32.totalorder %s17, 1
    %p61 = por %p59, %p60
    %p63 = scmp.ne.s32.totalorder %s48, %s62
    %p64 = scmp.eq.s32.totalorder %s17, 0
    %p65 = por %p63, %p64
    %s67 = sadd.s32 %s66, 1
    %p70 = scmp.eq.s32.totalorder %s11, 1
    %p71 = scmp.ne.s32.totalorder %s66, %s68
    %p72 = scmp.eq.s32.totalorder %s11, 0
    %p73 = por %p71, %p72
    %p74 = scmp.ne.s32.totalorder %s66, %s68
    %p75 = scmp.eq.s32.totalorder %s16, 1
    %p76 = por %p74, %p75
    %p77 = scmp.ne.s32.totalorder %s68, %s69
    %p78 = scmp.eq.s32.totalorder %s16, 0
    %p79 = por %p77, %p78
    %p80 = scmp.ne.s32.totalorder %s68, %s69
    %p81 = scmp.eq.s32.totalorder %s17, 1
    %p82 = por %p80, %p81
    %p84 = scmp.ne.s32.totalorder %s69, %s83
    %p85 = scmp.eq.s32.totalorder %s17, 0
    %p86 = por %p84, %p85
    %s88 = sadd.s32 %s87, 1
    %p91 = scmp.eq.s32.totalorder %s11, 1
    %p92 = scmp.ne.s32.totalorder %s87, %s89
    %p93 = scmp.eq.s32.totalorder %s11, 0
    %p94 = por %p92, %p93
    %p95 = scmp.ne.s32.totalorder %s87, %s89
    %p96 = scmp.eq.s32.totalorder %s16, 1
    %p97 = por %p95, %p96
    %p98 = scmp.ne.s32.totalorder %s89, %s90
    %p99 = scmp.eq.s32.totalorder %s16, 0
    %p100 = por %p98, %p99
    %p101 = scmp.ne.s32.totalorder %s89, %s90
    %p102 = scmp.eq.s32.totalorder %s17, 1
    %p103 = por %p101, %p102
    %p105 = scmp.ne.s32.totalorder %s90, %s104
    %p106 = scmp.eq.s32.totalorder %s17, 0
    %p107 = por %p105, %p106
    %s109 = sadd.s32 %s108, 1
    %p112 = scmp.eq.s32.totalorder %s11, 1
    %p113 = scmp.ne.s32.totalorder %s108, %s110
    %p114 = scmp.eq.s32.totalorder %s11, 0
    %p115 = por %p113, %p114
    %p116 = scmp.ne.s32.totalorder %s108, %s110
    %p117 = scmp.eq.s32.totalorder %s16, 1
    %p118 = por %p116, %p117
    %p119 = scmp.ne.s32.totalorder %s110, %s111
    %p120 = scmp.eq.s32.totalorder %s16, 0
    %p121 = por %p119, %p120
    %p122 = scmp.ne.s32.totalorder %s110, %s111
    %p123 = scmp.eq.s32.totalorder %s17, 1
    %p124 = por %p122, %p123
    %p126 = scmp.ne.s32.totalorder %s111, %s125
    %p127 = scmp.eq.s32.totalorder %s17, 0
    %p128 = por %p126, %p127
    %s129 = ssub.s32 %s11, %s18
    %p130 = scmp.eq.s32.totalorder %s129, 0
    %s132 = sadd.s32 %s131, 1
    %s133 = scalar_select %p130, %s131, %s132
    %p136 = pneg %p130
    %p137 = scmp.eq.s32.totalorder %s11, 1
    %p138 = por %p136, %p137
    %p139 = scmp.ne.s32.totalorder %s131, %s134
    %p140 = scmp.eq.s32.totalorder %s11, 0
    %p141 = por %p139, %p140
    %p142 = scmp.ne.s32.totalorder %s131, %s134
    %p143 = scmp.eq.s32.totalorder %s16, 1
    %p144 = por %p142, %p143
    %p145 = scmp.ne.s32.totalorder %s134, %s135
    %p146 = scmp.eq.s32.totalorder %s16, 0
    %p147 = por %p145, %p146
    %p148 = scmp.ne.s32.totalorder %s134, %s135
    %p149 = scmp.eq.s32.totalorder %s17, 1
    %p150 = por %p148, %p149
    %p152 = scmp.ne.s32.totalorder %s135, %s151
    %p153 = scmp.eq.s32.totalorder %s17, 0
    %p154 = por %p152, %p153
    %p155 = scmp.le.s32.totalorder 1, %s11
    %p156 = scmp.lt.s32.totalorder %s11, 3
    %p157 = pnand %p155, %p156
    %p158 = pneg %p157
    // Predicated region
    $region9: #{simple_nn_forward.1} parent=5 // pred_check
      _
    $region10: #{simple_nn_forward.1} parent=5 // pred_check_branch
      %160 = sbr.rel (%p157) target = $region12
    $region11: #{simple_nn_forward.1} parent=5 // pred_region
      %s161 = ssub.s32 %s11, 1
      // Predicated region
      $region13: #{simple_nn_forward.1} parent=11 // pred_check
        %p162 = pneg %p58
      $region14: #{simple_nn_forward.1} parent=11 // pred_check_branch
        %164 = sbr.rel (%p162) target = $region16
      $region15: #{simple_nn_forward.1} parent=11 // pred_region
        _
      $region16: #{simple_nn_forward.1} parent=11 // pred_fallthru
        _
      // Predicated region
      $region17: #{simple_nn_forward.1} parent=11 // pred_check
        %p165 = pneg %p79
      $region18: #{simple_nn_forward.1} parent=11 // pred_check_branch
        %167 = sbr.rel (%p165) target = $region20
      $region19: #{simple_nn_forward.1} parent=11 // pred_region
        _
      $region20: #{simple_nn_forward.1} parent=11 // pred_fallthru
        _
      // Predicated region
      $region21: #{simple_nn_forward.1} parent=11 // pred_check
        %p168 = pneg %p100
      $region22: #{simple_nn_forward.1} parent=11 // pred_check_branch
        %170 = sbr.rel (%p168) target = $region24
      $region23: #{simple_nn_forward.1} parent=11 // pred_region
        _
      $region24: #{simple_nn_forward.1} parent=11 // pred_fallthru
        _
      // Predicated region
      $region25: #{simple_nn_forward.1} parent=11 // pred_check
        %p171 = pneg %p121
      $region26: #{simple_nn_forward.1} parent=11 // pred_check_branch
        %173 = sbr.rel (%p171) target = $region28
      $region27: #{simple_nn_forward.1} parent=11 // pred_region
        _
      $region28: #{simple_nn_forward.1} parent=11 // pred_fallthru
        _
    $region12: #{simple_nn_forward.1} parent=5 // pred_fallthru
      _
    %p174 = scmp.lt.s32.totalorder %s11, 2
    // Predicated region
    $region29: #{simple_nn_forward.1} parent=5 // pred_check
      %p175 = pneg %p174
    $region30: #{simple_nn_forward.1} parent=5 // pred_check_branch
      %177 = sbr.rel (%p175) target = $region32
    $region31: #{simple_nn_forward.1} parent=5 // pred_region
      // Predicated region
      $region33: #{simple_nn_forward.1} parent=31 // pred_check
        %p178 = pneg %p31
      $region34: #{simple_nn_forward.1} parent=31 // pred_check_branch
        %180 = sbr.rel (%p178) target = $region36
      $region35: #{simple_nn_forward.1} parent=31 // pred_region
        %s181 = smul.u32 4, %s11
        %p182 = scmp.lt.s32.totalorder %s181, 7
        %s183 = scalar_select %p182, %s181, 7
        %s184 = smul.addr %s183, 8
        %s185 = scalar_lea.vmem %s0, %s184
        %s186 = smul.u32 4, %s11
      $region36: #{simple_nn_forward.1} parent=31 // pred_fallthru
        _
    $region32: #{simple_nn_forward.1} parent=5 // pred_fallthru
      _
    %p187 = scmp.le.s32.totalorder 1, %s11
    %p188 = scmp.lt.s32.totalorder %s11, 3
    %p189 = pnand %p187, %p188
    %p190 = pneg %p189
    // Predicated region
    $region37: #{simple_nn_forward.1} parent=5 // pred_check
      _
    $region38: #{simple_nn_forward.1} parent=5 // pred_check_branch
      %192 = sbr.rel (%p189) target = $region40
    $region39: #{simple_nn_forward.1} parent=5 // pred_region
      %s193 = ssub.s32 %s11, 1
      %s194 = smul.u32 4, %s16
      %p195 = scmp.lt.s32.totalorder %s194, 7
      %s196 = scalar_select %p195, %s194, 7
      %s197 = smul.addr %s196, 8
      %s198 = scalar_lea.vmem %s0, %s197
      %p199 = pneg %p37
      %p200 = pneg %p34
      %p201 = pneg %p58
      %p202 = pneg %p55
      %p203 = pneg %p79
      %p204 = pneg %p76
      %p205 = pneg %p100
      %p206 = pneg %p97
      %p207 = pneg %p121
      %p208 = pneg %p118
      %p209 = pneg %p147
      %p210 = pneg %p144
      %s211 = smul.u32 4, %s16
      %p212 = scmp.lt.s32.totalorder %s211, 7
      %s213 = scalar_select %p212, %s211, 7
      %s214 = smul.addr %s213, 8
      %s215 = scalar_lea.vmem %s5, %s214
      %s216 = smul.u32 4, %s16
      %p217 = scmp.lt.s32.totalorder %s216, 7
      %s218 = scalar_select %p217, %s216, 7
      %s219 = smul.addr %s218, 8
      %s220 = scalar_lea.vmem %s0, %s219
      %s221 = smul.u32 4, %s16
      %s222 = smul.u32 4, %s16
      %p223 = scmp.lt.s32.totalorder %s222, 7
      %s224 = scalar_select %p223, %s222, 7
      %s225 = smul.addr %s224, 8
      %s226 = scalar_lea.vmem %s5, %s225
      %s227 = smul.u32 4, %s16
      %v229 = vld [vmem:[%s220] sm:$0xff]
      %v230 = vld [vmem:[%s220 + $0x8] sm:$0xff]
      %v231 = vld [vmem:[%s220 + $0x10] sm:$0xff]
      %v232 = vld [vmem:[%s220 + $0x18] sm:$0xff]
      %v233 = vpack.c.bf16 %v230, %v229
      %v234 = vpack.c.bf16 %v232, %v231
      %v235 = vld [vmem:[%s1] sm:$0xf]
      %v236 = vld [vmem:[%s1 + $0x4] sm:$0xf]
      %v237 = vld [vmem:[%s1 + $0x8] sm:$0xf]
      %v238 = vld [vmem:[%s1 + $0xc] sm:$0xf]
      %v239 = vld [vmem:[%s2] sm:$0x1]
      %v241 = vlaneseq
      %v242 = vshrl.u32 %v241, 7
      %v243 = vsub.s32 0, %v242
      %v244 = vrot.slane %v239, %v243
      %v250 = vunpack.c.l.b16 %v235
      %v251 = vunpack.c.l.b16 %v236
      %v252 = vunpack.c.l.b16 %v237
      %v253 = vunpack.c.l.b16 %v238
      %v254 = vpack.c.b16 %v251, %v250
      %v255 = vpack.c.b16 %v253, %v252
      %vm258 = vcmask 261120
      %v260 = vsel %vm258, %v233, 0
      %v263 = vsel %vm258, %v234, 0
      %265 = vmatprep.subr.bf16.mxu0 0
      %266 = vmatpush1.bf16.msra.mxu0 %v254
      %267 = vmatprep.subr.bf16.mxu0 0
      %268 = vmatpush1.bf16.msra.mxu0 %v255
      %269 = vmatprep.subr.bf16.mxu0 0
      %270 = vmatpush1.bf16.msra.mxu0 0
      %271 = vmatprep.subr.bf16.mxu0 0
      %272 = vmatpush1.bf16.msra.mxu0 0
      %273 = vmatprep.subr.bf16.mxu0 0
      %274 = vmatpush1.bf16.msra.mxu0 0
      %275 = vmatprep.subr.bf16.mxu0 0
      %276 = vmatpush1.bf16.msra.mxu0 0
      %277 = vmatprep.subr.bf16.mxu0 0
      %278 = vmatpush1.bf16.msra.mxu0 0
      %279 = vmatprep.subr.bf16.mxu0 0
      %280 = vmatpush1.bf16.msra.mxu0 0
      %281 = vmatprep.subr.bf16.mxu0 0
      %282 = vmatpush1.bf16.msra.mxu0 0
      %283 = vmatprep.subr.bf16.mxu0 0
      %284 = vmatpush1.bf16.msra.mxu0 0
      %285 = vmatprep.subr.bf16.mxu0 0
      %286 = vmatpush1.bf16.msra.mxu0 0
      %287 = vmatprep.subr.bf16.mxu0 0
      %288 = vmatpush1.bf16.msra.mxu0 0
      %289 = vmatprep.subr.bf16.mxu0 0
      %290 = vmatpush1.bf16.msra.mxu0 0
      %291 = vmatprep.subr.bf16.mxu0 0
      %292 = vmatpush1.bf16.msra.mxu0 0
      %293 = vmatprep.subr.bf16.mxu0 0
      %294 = vmatpush1.bf16.msra.mxu0 0
      %295 = vmatprep.subr.bf16.mxu0 0
      %296 = vmatpush1.bf16.msra.mxu0 0
      %297 = vmatprep.mubr.bf16.mxu0 0
      %298 = vmatmul.mubr.bf16.gmra.mrb[0].mxu0 %v260
      %v299 = vpop.f32.mrb[0].mxu0
      %v300 = vadd.f32 %v244, %v299
      %v301 = vpop.f32.mrb[0].mxu0
      %v302 = vpop.f32.mrb[0].mxu0
      %v303 = vadd.f32 %v244, %v302
      %v304 = vpop.f32.mrb[0].mxu0
      %305 = vmatprep.mubr.bf16.mxu0 0
      %306 = vmatmul.mubr.bf16.gmra.mrb[0].mxu0 %v263
      %v307 = vpop.f32.mrb[0].mxu0
      %v308 = vadd.f32 %v244, %v307
      %v309 = vpop.f32.mrb[0].mxu0
      %v310 = vpop.f32.mrb[0].mxu0
      %v311 = vadd.f32 %v244, %v310
      %v312 = vpop.f32.mrb[0].mxu0
      %313 = vdwg.mxu0
      %v314 = vmax.f32 %v300, 0.0
      %v315 = vmax.f32 %v303, 0.0
      %v316 = vmax.f32 %v308, 0.0
      %v317 = vmax.f32 %v311, 0.0
      %v318 = vpack.c.bf16 %v315, %v314
      %v319 = vpack.c.bf16 %v317, %v316
      %v320 = vld [vmem:[%s3] sm:$0xf]
      %v321 = vld [vmem:[%s3 + $0x4] sm:$0xf]
      %v322 = vld [vmem:[%s3 + $0x8] sm:$0xf]
      %v323 = vld [vmem:[%s3 + $0xc] sm:$0xf]
      %v324 = vld [vmem:[%s3 + $0x10] sm:$0xf]
      %v325 = vld [vmem:[%s3 + $0x14] sm:$0xf]
      %v326 = vld [vmem:[%s3 + $0x18] sm:$0xf]
      %v327 = vld [vmem:[%s3 + $0x1c] sm:$0xf]
      %v328 = vld [vmem:[%s3 + $0x20] sm:$0xf]
      %v329 = vld [vmem:[%s3 + $0x24] sm:$0xf]
      %v330 = vld [vmem:[%s3 + $0x28] sm:$0xf]
      %v331 = vld [vmem:[%s3 + $0x2c] sm:$0xf]
      %v332 = vld [vmem:[%s3 + $0x30] sm:$0xf]
      %v333 = vld [vmem:[%s3 + $0x34] sm:$0xf]
      %v334 = vld [vmem:[%s3 + $0x38] sm:$0xf]
      %v335 = vld [vmem:[%s3 + $0x3c] sm:$0xf]
      %v336 = vld [vmem:[%s4] sm:$0x1]
      %v338 = vlaneseq
      %v339 = vshrl.u32 %v338, 7
      %v340 = vsub.s32 0, %v339
      %v341 = vrot.slane %v336, %v340
      %v359 = vunpack.c.l.b16 %v320
      %v360 = vunpack.c.l.b16 %v321
      %v361 = vunpack.c.l.b16 %v322
      %v362 = vunpack.c.l.b16 %v323
      %v363 = vunpack.c.l.b16 %v324
      %v364 = vunpack.c.l.b16 %v325
      %v365 = vunpack.c.l.b16 %v326
      %v366 = vunpack.c.l.b16 %v327
      %v367 = vunpack.c.l.b16 %v328
      %v368 = vunpack.c.l.b16 %v329
      %v369 = vunpack.c.l.b16 %v330
      %v370 = vunpack.c.l.b16 %v331
      %v371 = vunpack.c.l.b16 %v332
      %v372 = vunpack.c.l.b16 %v333
      %v373 = vunpack.c.l.b16 %v334
      %v374 = vunpack.c.l.b16 %v335
      %v375 = vpack.c.b16 %v360, %v359
      %v376 = vpack.c.b16 %v362, %v361
      %v377 = vpack.c.b16 %v364, %v363
      %v378 = vpack.c.b16 %v366, %v365
      %v379 = vpack.c.b16 %v368, %v367
      %v380 = vpack.c.b16 %v370, %v369
      %v381 = vpack.c.b16 %v372, %v371
      %v382 = vpack.c.b16 %v374, %v373
      %391 = vmatprep.subr.bf16.mxu0 0
      %392 = vmatpush1.bf16.msra.mxu0 %v375
      %393 = vmatprep.subr.bf16.mxu0 0
      %394 = vmatpush1.bf16.msra.mxu0 %v376
      %395 = vmatprep.subr.bf16.mxu0 0
      %396 = vmatpush1.bf16.msra.mxu0 %v377
      %397 = vmatprep.subr.bf16.mxu0 0
      %398 = vmatpush1.bf16.msra.mxu0 %v378
      %399 = vmatprep.subr.bf16.mxu0 0
      %400 = vmatpush1.bf16.msra.mxu0 %v379
      %401 = vmatprep.subr.bf16.mxu0 0
      %402 = vmatpush1.bf16.msra.mxu0 %v380
      %403 = vmatprep.subr.bf16.mxu0 0
      %404 = vmatpush1.bf16.msra.mxu0 %v381
      %405 = vmatprep.subr.bf16.mxu0 0
      %406 = vmatpush1.bf16.msra.mxu0 %v382
      %407 = vmatprep.subr.bf16.mxu0 0
      %408 = vmatpush1.bf16.msra.mxu0 0
      %409 = vmatprep.subr.bf16.mxu0 0
      %410 = vmatpush1.bf16.msra.mxu0 0
      %411 = vmatprep.subr.bf16.mxu0 0
      %412 = vmatpush1.bf16.msra.mxu0 0
      %413 = vmatprep.subr.bf16.mxu0 0
      %414 = vmatpush1.bf16.msra.mxu0 0
      %415 = vmatprep.subr.bf16.mxu0 0
      %416 = vmatpush1.bf16.msra.mxu0 0
      %417 = vmatprep.subr.bf16.mxu0 0
      %418 = vmatpush1.bf16.msra.mxu0 0
      %419 = vmatprep.subr.bf16.mxu0 0
      %420 = vmatpush1.bf16.msra.mxu0 0
      %421 = vmatprep.subr.bf16.mxu0 0
      %422 = vmatpush1.bf16.msra.mxu0 0
      %423 = vmatprep.mubr.bf16.mxu0 0
      %424 = vmatmul.mubr.bf16.gmra.mrb[0].mxu0 %v318
      %v425 = vpop.f32.mrb[0].mxu0
      %v426 = vadd.f32 %v341, %v425
      %v427 = vpop.f32.mrb[0].mxu0
      %v428 = vpop.f32.mrb[0].mxu0
      %v429 = vadd.f32 %v341, %v428
      %v430 = vpop.f32.mrb[0].mxu0
      %431 = vmatprep.mubr.bf16.mxu0 0
      %432 = vmatmul.mubr.bf16.gmra.mrb[0].mxu0 %v319
      %v433 = vpop.f32.mrb[0].mxu0
      %v434 = vadd.f32 %v341, %v433
      %v435 = vpop.f32.mrb[0].mxu0
      %v436 = vpop.f32.mrb[0].mxu0
      %v437 = vadd.f32 %v341, %v436
      %v438 = vpop.f32.mrb[0].mxu0
      %439 = vdwg.mxu0
      %440 = vst [vmem:[%s226] sm:$0xff] %v426
      %441 = vst [vmem:[%s226 + $0x8] sm:$0xff] %v429
      %442 = vst [vmem:[%s226 + $0x10] sm:$0xff] %v434
      %443 = vst [vmem:[%s226 + $0x18] sm:$0xff] %v437
      %s444 = smul.u32 4, %s16
      %p445 = scmp.lt.s32.totalorder %s444, 7
      %s446 = scalar_select %p445, %s444, 7
      %s447 = smul.addr %s446, 8
      %s448 = scalar_lea.vmem %s5, %s447
      // Predicated region
      $region41: #{simple_nn_forward.1} parent=39 // pred_check
        %p449 = pneg %p144
      $region42: #{simple_nn_forward.1} parent=39 // pred_check_branch
        %451 = sbr.rel (%p449) target = $region44
      $region43: #{simple_nn_forward.1} parent=39 // pred_region
        %s452 = smul.u32 4, %s16
      $region44: #{simple_nn_forward.1} parent=39 // pred_fallthru
        _
    $region40: #{simple_nn_forward.1} parent=5 // pred_fallthru
      _
    %p453 = scmp.le.s32.totalorder 2, %s11
    // Predicated region
    $region45: #{simple_nn_forward.1} parent=5 // pred_check
      %p454 = pneg %p453
    $region46: #{simple_nn_forward.1} parent=5 // pred_check_branch
      %456 = sbr.rel (%p454) target = $region48
    $region47: #{simple_nn_forward.1} parent=5 // pred_region
      %s457 = ssub.s32 %s11, 2
      // Predicated region
      $region49: #{simple_nn_forward.1} parent=47 // pred_check
        %p458 = pneg %p150
      $region50: #{simple_nn_forward.1} parent=47 // pred_check_branch
        %460 = sbr.rel (%p458) target = $region52
      $region51: #{simple_nn_forward.1} parent=47 // pred_region
        %s461 = smul.u32 4, %s17
        %p462 = scmp.lt.s32.totalorder %s461, 7
        %s463 = scalar_select %p462, %s461, 7
        %s464 = smul.addr %s463, 8
        %s465 = scalar_lea.vmem %s5, %s464
      $region52: #{simple_nn_forward.1} parent=47 // pred_fallthru
        _
    $region48: #{simple_nn_forward.1} parent=5 // pred_fallthru
      _
  $region6: #{simple_nn_forward.1} parent=0 // loop_footer
    %s15 = sadd.s32 1, %s11
  $region7: #{simple_nn_forward.1} parent=0 // loop_footer_branch
    %10 = sbr.rel target = $region3
  $region8: #{simple_nn_forward.1} parent=0 // loop_exit
    _

</llo_original>
